<compile_context>
chip_gen: v6e
topology: v6e:2x2x1
jax: 0.10.0
libtpu: 0.0.40
codegen_flags: <defaults>
</compile_context>

<pallas_src>
import jax
import jax.numpy as jnp
from jax.experimental import pallas as pl
from jax.experimental.pallas import tpu as pltpu

GAMMA_NEG = 4.0
GAMMA_POS = 1.0
CLIP = 0.05
EPS = 1e-8

_LANES = 1024  # lane-dense slab width (large multiple of 128)


def _asl_kernel(x_ref, y_ref, out_ref):
    """x_ref, y_ref: (TILE_M, LANES) tiles; out_ref: (1, 1, LANES) resident partial."""
    i = pl.program_id(1)

    @pl.when(i == 0)
    def _():
        out_ref[...] = jnp.zeros_like(out_ref)

    x = x_ref[...].astype(jnp.float32)
    y = y_ref[...].astype(jnp.float32)

    # sigmoid via a single tanh -> one EUP op instead of exp + reciprocal.
    x_sigmoid = 0.5 * jnp.tanh(0.5 * x) + 0.5
    xs_pos = x_sigmoid
    # clip (probability shifting), clamp(max=1)
    xs_neg = jnp.minimum(1.0 - x_sigmoid + CLIP, 1.0)

    # y is binarized {0,1}: pt picks xs_pos for positives and (shifted) xs_neg
    # for negatives, so the reference's two log terms collapse into a single
    # log(pt). (Soft / label-smoothed targets would need the two-term form.)
    is_pos = y > 0.5
    pt = jnp.where(is_pos, xs_pos, xs_neg)
    loss = jnp.log(jnp.maximum(pt, EPS))

    # (1 - pt) ** (GAMMA_POS*y + GAMMA_NEG*(1-y)) with binary y and gammas (1, 4):
    # integer squarings + select (pure VPU) instead of a variable-exponent power
    # (exp + log) on the single EUP slot. Revert to jnp.power if gammas change.
    one_m_pt = 1.0 - pt
    sq = one_m_pt * one_m_pt
    one_sided_w = jnp.where(is_pos, one_m_pt, sq * sq)
    # TODO(synk): forward-only — matching disable_torch_grad_focal_loss=True under
    # jax.grad requires a custom VJP that detaches one_sided_w.
    loss = loss * one_sided_w

    # Cheap sublane reduce per step + lane-dense accumulate; the expensive
    # cross-lane reduce to a scalar happens once, in the wrapper.
    partial = jnp.sum(loss, axis=0, keepdims=True)   # (1, LANES)
    out_ref[...] += partial[None, :, :]              # (1, 1, LANES)


def _sublane_multiple(dtype):
    # Min second-to-last tile dim by itemsize: f32 -> 8, bf16/f16 -> 16, int8 -> 32.
    return {4: 8, 2: 16, 1: 32}.get(jnp.dtype(dtype).itemsize, 8)


def _chip_defaults():
    """(combined-input block bytes, scoped VMEM limit, row splits) per chip gen."""
    try:
        kind = jax.devices()[0].device_kind.lower()
    except Exception:
        kind = ""
    if "v7" in kind:
        # 64 MiB VMEM per TC: keep ~4 MiB per-input blocks; 2 TCs -> 2 row splits.
        return 8 * 1024 * 1024, 48 * 1024 * 1024, 2
    # v5e / v6e: single TC, 128 MiB VMEM -> bigger blocks, no row split.
    return 16 * 1024 * 1024, 64 * 1024 * 1024, 1


def asymmetric_loss(x, y, *, lanes=_LANES, target_block_bytes=None,
                    vmem_limit_bytes=None, num_splits=None):
    """Forward of AsymmetricLoss(gamma_neg=4, gamma_pos=1, clip=0.05, eps=1e-8).

    x: logits (f32 or bf16); y: binarized targets in {0,1} (float, bf16 or int8).
    target_block_bytes counts the combined x+y bytes per pipeline step.
    """
    assert x.shape == y.shape
    d_tb, d_vm, d_ns = _chip_defaults()
    target_block_bytes = d_tb if target_block_bytes is None else target_block_bytes
    vmem_limit_bytes = d_vm if vmem_limit_bytes is None else vmem_limit_bytes
    num_splits = d_ns if num_splits is None else num_splits

    # Flatten to a lane-dense (M, lanes) slab: full vreg occupancy and unmasked
    # output stores regardless of the class count C (e.g. C = 20 or 80).
    x_flat = x.reshape(-1)
    y_flat = y.reshape(-1)
    total = x_flat.shape[0]

    # Row (sublane) multiple must satisfy the narrowest dtype's min-tile rule.
    row_mult = max(_sublane_multiple(x.dtype), _sublane_multiple(y.dtype))
    bytes_per_row = lanes * (jnp.dtype(x.dtype).itemsize + jnp.dtype(y.dtype).itemsize)
    max_rows = max(row_mult,
                   (target_block_bytes // bytes_per_row) // row_mult * row_mult)

    rows_needed = pl.cdiv(total, lanes)
    rows_per_split = pl.cdiv(rows_needed, num_splits)
    tile_m = min(max_rows, max(row_mult, pl.cdiv(rows_per_split, row_mult) * row_mult))

    inner_steps = pl.cdiv(pl.cdiv(rows_needed, tile_m), num_splits)
    rows_pad = num_splits * inner_steps * tile_m
    total_pad = rows_pad * lanes

    if total_pad != total:
        # Padding contributes exactly zero loss:
        #   x = -30 -> sigmoid ~ 0, clipped xs_neg == 1 -> log term 0
        #   y = 0   -> pt == 1  -> focal weight (1 - pt)^4 == 0
        pad = total_pad - total
        x_flat = jnp.concatenate([x_flat, jnp.full((pad,), -30.0, dtype=x.dtype)])
        y_flat = jnp.concatenate([y_flat, jnp.zeros((pad,), dtype=y.dtype)])

    x2 = x_flat.reshape(rows_pad, lanes)
    y2 = y_flat.reshape(rows_pad, lanes)

    out = pl.pallas_call(
        _asl_kernel,
        out_shape=jax.ShapeDtypeStruct((num_splits, 1, lanes), jnp.float32),
        grid_spec=pltpu.PrefetchScalarGridSpec(
            num_scalar_prefetch=0,
            grid=(num_splits, inner_steps),
            in_specs=[
                pl.BlockSpec((tile_m, lanes), lambda c, i: (c * inner_steps + i, 0)),
                pl.BlockSpec((tile_m, lanes), lambda c, i: (c * inner_steps + i, 0)),
            ],
            # One lane-dense resident partial per row split.
            out_specs=pl.BlockSpec((1, 1, lanes), lambda c, i: (c, 0, 0)),
        ),
        compiler_params=pltpu.CompilerParams(
            dimension_semantics=("parallel", "arbitrary"),
            vmem_limit_bytes=vmem_limit_bytes,
        ),
    )(x2, y2)

    # Tiny final cross-lane / cross-split reduce done by XLA.
    return -jnp.sum(out)


def asymmetric_loss_ref(x, y):
    """Pure-JAX reference mirroring the PyTorch forward exactly (incl. jnp.power)."""
    x = x.astype(jnp.float32)
    y = y.astype(jnp.float32)
    x_sigmoid = jax.nn.sigmoid(x)
    xs_pos = x_sigmoid
    xs_neg = jnp.minimum(1.0 - x_sigmoid + CLIP, 1.0)
    los_pos = y * jnp.log(jnp.maximum(xs_pos, EPS))
    los_neg = (1.0 - y) * jnp.log(jnp.maximum(xs_neg, EPS))
    loss = los_pos + los_neg
    pt = xs_pos * y + xs_neg * (1.0 - y)
    gamma = GAMMA_POS * y + GAMMA_NEG * (1.0 - y)
    loss = loss * jnp.power(1.0 - pt, gamma)
    return -jnp.sum(loss)


if __name__ == "__main__":
    key = jax.random.PRNGKey(0)
    k1, k2 = jax.random.split(key)

    # Case 1: f32 logits / f32 targets, lane-aligned class count, chip defaults.
    N, C = 16, 128
    x = jax.random.normal(k1, (N, C), dtype=jnp.float32)              # logits
    y = (jax.random.uniform(k2, (N, C)) > 0.5).astype(jnp.float32)    # binarized targets
    out = jax.block_until_ready(asymmetric_loss(x, y))
    ref = asymmetric_loss_ref(x, y)
    assert jnp.allclose(out, ref, rtol=1e-4, atol=1e-2), (out, ref)

    # Case 2: non-lane-aligned class count (C=80) and odd N -> flatten-to-slab +
    # padding path; tiny block budget and num_splits=1 to force several inner
    # pipeline steps (exercises the @pl.when(i == 0) accumulator init).
    N2, C2 = 20, 80
    x2 = jax.random.normal(k1, (N2, C2), dtype=jnp.float32)
    y2 = (jax.random.uniform(k2, (N2, C2)) > 0.5).astype(jnp.float32)
    out2 = jax.block_until_ready(
        asymmetric_loss(x2, y2, lanes=128, target_block_bytes=8 * 128 * 8,
                        num_splits=1)
    )
    ref2 = asymmetric_loss_ref(x2, y2)
    assert jnp.allclose(out2, ref2, rtol=1e-4, atol=1e-2), (out2, ref2)

    # Case 3: narrow dtypes (bf16 logits + int8 targets) -> ~2.5x fewer HBM bytes;
    # exercises the 32-row sublane-multiple tiling path.
    N3, C3 = 24, 384
    x3 = jax.random.normal(k1, (N3, C3), dtype=jnp.float32).astype(jnp.bfloat16)
    y3 = (jax.random.uniform(k2, (N3, C3)) > 0.5).astype(jnp.int8)
    out3 = jax.block_until_ready(asymmetric_loss(x3, y3))
    ref3 = asymmetric_loss_ref(x3, y3)
    assert jnp.allclose(out3, ref3, rtol=1e-3, atol=1e-1), (out3, ref3)

    print("KERNEL_OK")
</pallas_src>

<mosaic_0001>
module attributes {stable_mosaic.version = 11 : i64} {
  func.func @_asl_kernel(%arg0: i32, %arg1: i32, %arg2: memref<8x1024xf32, #tpu.memory_space<vmem>>, %arg3: memref<8x1024xf32, #tpu.memory_space<vmem>>, %arg4: memref<1x1x1024xf32, #tpu.memory_space<vmem>>) attributes {dimension_semantics = [#tpu.dimension_semantics<parallel>, #tpu.dimension_semantics<arbitrary>], iteration_bounds = array<i64: 1, 1>, scalar_prefetch = 0 : i64, scratch_operands = 0 : i64, tpu.core_type = #tpu.core_type<tc>, window_params = [{transform_indices = @transform_0, window_bounds = array<i64: 8, 1024>}, {transform_indices = @transform_1, window_bounds = array<i64: 8, 1024>}, {transform_indices = @transform_2, window_bounds = array<i64: 1, 1, 1024>}]} {
    %c0_i32 = arith.constant 0 : i32
    %0 = arith.cmpi eq, %arg1, %c0_i32 : i32
    %1 = arith.extui %0 : i1 to i32
    %c0_i32_0 = arith.constant 0 : i32
    %2 = arith.cmpi ne, %1, %c0_i32_0 : i32
    scf.if %2 {
      %cst_19 = arith.constant 0.000000e+00 : f32
      %36 = vector.broadcast %cst_19 : f32 to vector<1x1x1024xf32>
      %c0_20 = arith.constant 0 : index
      %c0_21 = arith.constant 0 : index
      %c0_22 = arith.constant 0 : index
      %37 = vector.load %arg4[%c0_20, %c0_21, %c0_22] : memref<1x1x1024xf32, #tpu.memory_space<vmem>>, vector<1x1x1024xf32>
      tpu.vector_store %arg4[%c0_20, %c0_21, %c0_22], %36 {strides = array<i32>} : memref<1x1x1024xf32, #tpu.memory_space<vmem>>, vector<1x1x1024xf32>,
    } else {
    }
    %c0 = arith.constant 0 : index
    %c0_1 = arith.constant 0 : index
    %3 = vector.load %arg2[%c0, %c0_1] : memref<8x1024xf32, #tpu.memory_space<vmem>>, vector<8x1024xf32>
    %c0_2 = arith.constant 0 : index
    %c0_3 = arith.constant 0 : index
    %4 = vector.load %arg3[%c0_2, %c0_3] : memref<8x1024xf32, #tpu.memory_space<vmem>>, vector<8x1024xf32>
    %cst = arith.constant 5.000000e-01 : f32
    %5 = vector.broadcast %cst : f32 to vector<8x1024xf32>
    %6 = arith.mulf %5, %3 : vector<8x1024xf32>
    %7 = math.tanh %6 : vector<8x1024xf32>
    %cst_4 = arith.constant 5.000000e-01 : f32
    %8 = vector.broadcast %cst_4 : f32 to vector<8x1024xf32>
    %9 = arith.mulf %8, %7 : vector<8x1024xf32>
    %cst_5 = arith.constant 5.000000e-01 : f32
    %10 = vector.broadcast %cst_5 : f32 to vector<8x1024xf32>
    %11 = arith.addf %9, %10 : vector<8x1024xf32>
    %cst_6 = arith.constant 1.000000e+00 : f32
    %12 = vector.broadcast %cst_6 : f32 to vector<8x1024xf32>
    %13 = arith.subf %12, %11 : vector<8x1024xf32>
    %cst_7 = arith.constant 5.000000e-02 : f32
    %14 = vector.broadcast %cst_7 : f32 to vector<8x1024xf32>
    %15 = arith.addf %13, %14 : vector<8x1024xf32>
    %cst_8 = arith.constant 1.000000e+00 : f32
    %16 = vector.broadcast %cst_8 : f32 to vector<8x1024xf32>
    %17 = arith.minimumf %15, %16 : vector<8x1024xf32>
    %cst_9 = arith.constant 5.000000e-01 : f32
    %18 = vector.broadcast %cst_9 : f32 to vector<8x1024xf32>
    %19 = arith.cmpf ogt, %4, %18 : vector<8x1024xf32>
    %20 = arith.select %19, %11, %17 : vector<8x1024xi1>, vector<8x1024xf32>
    %cst_10 = arith.constant 9.99999993E-9 : f32
    %21 = vector.broadcast %cst_10 : f32 to vector<8x1024xf32>
    %22 = arith.maximumf %20, %21 : vector<8x1024xf32>
    %23 = math.log %22 : vector<8x1024xf32>
    %cst_11 = arith.constant 1.000000e+00 : f32
    %24 = vector.broadcast %cst_11 : f32 to vector<8x1024xf32>
    %25 = arith.subf %24, %20 : vector<8x1024xf32>
    %26 = arith.mulf %25, %25 : vector<8x1024xf32>
    %27 = arith.mulf %26, %26 : vector<8x1024xf32>
    %28 = arith.select %19, %25, %27 : vector<8x1024xi1>, vector<8x1024xf32>
    %29 = arith.mulf %23, %28 : vector<8x1024xf32>
    %cst_12 = arith.constant dense<0.000000e+00> : vector<1024xf32>
    %30 = vector.multi_reduction <add>, %29, %cst_12 [0] : vector<8x1024xf32> to vector<1024xf32>
    %31 = vector.shape_cast %30 : vector<1024xf32> to vector<1x1024xf32>
    %c0_13 = arith.constant 0 : index
    %c0_14 = arith.constant 0 : index
    %c0_15 = arith.constant 0 : index
    %32 = vector.load %arg4[%c0_13, %c0_14, %c0_15] : memref<1x1x1024xf32, #tpu.memory_space<vmem>>, vector<1x1x1024xf32>
    %33 = vector.shape_cast %31 : vector<1x1024xf32> to vector<1x1x1024xf32>
    %34 = arith.addf %32, %33 : vector<1x1x1024xf32>
    %c0_16 = arith.constant 0 : index
    %c0_17 = arith.constant 0 : index
    %c0_18 = arith.constant 0 : index
    %35 = vector.load %arg4[%c0_16, %c0_17, %c0_18] : memref<1x1x1024xf32, #tpu.memory_space<vmem>>, vector<1x1x1024xf32>
    tpu.vector_store %arg4[%c0_16, %c0_17, %c0_18], %34 {strides = array<i32>} : memref<1x1x1024xf32, #tpu.memory_space<vmem>>, vector<1x1x1024xf32>,
    return
  }
  func.func @transform_0(%arg0: i32, %arg1: i32) -> (i32, i32) {
    %c1_i32 = arith.constant 1 : i32
    %0 = arith.muli %arg0, %c1_i32 : i32
    %1 = arith.addi %0, %arg1 : i32
    %c0_i32 = arith.constant 0 : i32
    %c0_i32_0 = arith.constant 0 : i32
    return %1, %c0_i32 : i32, i32
  }
  func.func @transform_1(%arg0: i32, %arg1: i32) -> (i32, i32) {
    %c1_i32 = arith.constant 1 : i32
    %0 = arith.muli %arg0, %c1_i32 : i32
    %1 = arith.addi %0, %arg1 : i32
    %c0_i32 = arith.constant 0 : i32
    %c0_i32_0 = arith.constant 0 : i32
    return %1, %c0_i32 : i32, i32
  }
  func.func @transform_2(%arg0: i32, %arg1: i32) -> (i32, i32, i32) {
    %c0_i32 = arith.constant 0 : i32
    %c0_i32_0 = arith.constant 0 : i32
    %c0_i32_1 = arith.constant 0 : i32
    return %arg0, %c0_i32, %c0_i32_0 : i32, i32, i32
  }
}

</mosaic_0001>

<llo_original>
// kernel: tpu_custom_call.1
$region0: #{tpu_custom_call.1}
  #allocation0 [shape = 'u32[]', space=smem, size = 0x4, offset = 0x4, fixed_abs, tag = 'smem constant byte address 0x4 - core index']
  #allocation1 [shape = 'u32[144,128]{1,0:T(1,128)}', space=vmem, size = 0x12000, scoped, tag = 'internal scratch']
  %s0 = inlined_call_operand.hbm [shape: f32[8,1024], index: 0, kind: input, shape index: {}]
  %s1 = inlined_call_operand.hbm [shape: f32[8,1024], index: 1, kind: input, shape index: {}]
  %s2 = inlined_call_operand.hbm [shape: f32[1,1,1024], index: 2, kind: output, shape index: {}]
  %s3 = sld [smem:[#allocation0]]
  $region30: #{tpu_custom_call.1} parent=0
    _
  %s5 = ssub.s32 1, %s3
  %s6 = scalar_select 0, %s5, %s3
  $region1: #{tpu_custom_call.1} parent=0
    #allocation2 [shape = 'u8[32768]{0}', space=vmem, size = 0x8000, scoped, tag = 'input window, operand 0, single buffered']
    #allocation3 [shape = 's32[1]{0}', space=sflag, size = 0x4, scoped, tag = 'scoped memory for tpu_custom_call.1']
    #allocation4 [shape = 's32[1]{0}', space=sflag, size = 0x4, scoped, tag = 'scoped memory for tpu_custom_call.1']
    #allocation5 [shape = 'u8[32768]{0}', space=vmem, size = 0x8000, scoped, tag = 'input window, operand 1, single buffered']
    #allocation6 [shape = 's32[1]{0}', space=sflag, size = 0x4, scoped, tag = 'scoped memory for tpu_custom_call.1']
    #allocation7 [shape = 'u8[4096]{0}', space=vmem, size = 0x1000, scoped, tag = 'output window, operand 0, single buffered']
    %7 = vsyncpa [#allocation3], 0
    %8 = vsyncpa [#allocation6], 0
    %9 = vsyncpa [#allocation4], 0
    // Predicated region
    $region2: #{tpu_custom_call.1} parent=1 // pred_check
      _
    $region3: #{tpu_custom_call.1} parent=1 // pred_check_branch
      %11 = sbr.rel (0) target = $region5
    $region4: #{tpu_custom_call.1} parent=1 // pred_region
      %s12 = sadd.s32 0, 0
      %s14 = ssub.s32 1024, 1024
      %15 = vsyncadd [#allocation3], %s14
      %s16 = smul.addr %s12, 8
      %s17 = smul.addr %s16, 128
      %s18 = scalar_lea.hbm %s0, %s17
      %s20 = sshll.u32 [#allocation2], 4
      %s21 = int_to_ptr.vmem [resolvable:$true] %s20
      %23 = dma.hbm_to_vmem [thread:$0]  %s18, 1024, %s21, [#allocation3]
    $region5: #{tpu_custom_call.1} parent=1 // pred_fallthru
      _
    // Predicated region
    $region6: #{tpu_custom_call.1} parent=1 // pred_check
      _
    $region7: #{tpu_custom_call.1} parent=1 // pred_check_branch
      %25 = sbr.rel (0) target = $region9
    $region8: #{tpu_custom_call.1} parent=1 // pred_region
      %s26 = sadd.s32 0, 0
      %s28 = ssub.s32 1024, 1024
      %29 = vsyncadd [#allocation6], %s28
      %s30 = smul.addr %s26, 8
      %s31 = smul.addr %s30, 128
      %s32 = scalar_lea.hbm %s1, %s31
      %s34 = sshll.u32 [#allocation5], 4
      %s35 = int_to_ptr.vmem [resolvable:$true] %s34
      %37 = dma.hbm_to_vmem [thread:$0]  %s32, 1024, %s35, [#allocation6]
    $region9: #{tpu_custom_call.1} parent=1 // pred_fallthru
      _
    // Predicated region
    $region10: #{tpu_custom_call.1} parent=1 // pred_check
      _
    $region11: #{tpu_custom_call.1} parent=1 // pred_check_branch
      %39 = sbr.rel (0) target = $region13
    $region12: #{tpu_custom_call.1} parent=1 // pred_region
      %40 = dma.done [#allocation3], 1024
    $region13: #{tpu_custom_call.1} parent=1 // pred_fallthru
      _
    // Predicated region
    $region14: #{tpu_custom_call.1} parent=1 // pred_check
      _
    $region15: #{tpu_custom_call.1} parent=1 // pred_check_branch
      %42 = sbr.rel (0) target = $region17
    $region16: #{tpu_custom_call.1} parent=1 // pred_region
      %43 = dma.done [#allocation6], 1024
    $region17: #{tpu_custom_call.1} parent=1 // pred_fallthru
      _
    %s44 = sadd.s32 0, 0
    %s45 = sadd.s32 0, 0
    %p46 = scmp.eq.s32.totalorder 0, 0
    // Predicated region
    $region18: #{tpu_custom_call.1} parent=1 // pred_check
      %p47 = pneg %p46
    $region19: #{tpu_custom_call.1} parent=1 // pred_check_branch
      %49 = sbr.rel (%p47) target = $region21
    $region20: #{tpu_custom_call.1} parent=1 // pred_region
      %50 = vst [vmem:[#allocation7] sm:$0xff] 0.0
    $region21: #{tpu_custom_call.1} parent=1 // pred_fallthru
      _
    %v51 = vld [vmem:[#allocation2] sm:$0xff]
    %v52 = vld [vmem:[#allocation2 + $0x8] sm:$0xff]
    %v53 = vld [vmem:[#allocation2 + $0x10] sm:$0xff]
    %v54 = vld [vmem:[#allocation2 + $0x18] sm:$0xff]
    %v55 = vld [vmem:[#allocation2 + $0x20] sm:$0xff]
    %v56 = vld [vmem:[#allocation2 + $0x28] sm:$0xff]
    %v57 = vld [vmem:[#allocation2 + $0x30] sm:$0xff]
    %v58 = vld [vmem:[#allocation2 + $0x38] sm:$0xff]
    %v59 = vld [vmem:[#allocation5] sm:$0xff]
    %v60 = vld [vmem:[#allocation5 + $0x8] sm:$0xff]
    %v61 = vld [vmem:[#allocation5 + $0x10] sm:$0xff]
    %v62 = vld [vmem:[#allocation5 + $0x18] sm:$0xff]
    %v63 = vld [vmem:[#allocation5 + $0x20] sm:$0xff]
    %v64 = vld [vmem:[#allocation5 + $0x28] sm:$0xff]
    %v65 = vld [vmem:[#allocation5 + $0x30] sm:$0xff]
    %v66 = vld [vmem:[#allocation5 + $0x38] sm:$0xff]
    %v67 = vmul.f32 %v51, 0.5
    %v68 = vmul.f32 %v52, 0.5
    %v69 = vmul.f32 %v53, 0.5
    %v70 = vmul.f32 %v54, 0.5
    %v71 = vmul.f32 %v55, 0.5
    %v72 = vmul.f32 %v56, 0.5
    %v73 = vmul.f32 %v57, 0.5
    %v74 = vmul.f32 %v58, 0.5
    %v75 = vtanh.pop %v67
    %v76 = vtanh.pop %v68
    %v77 = vtanh.pop %v69
    %v78 = vtanh.pop %v70
    %v79 = vtanh.pop %v71
    %v80 = vtanh.pop %v72
    %v81 = vtanh.pop %v73
    %v82 = vtanh.pop %v74
    %v83 = vmul.f32 %v75, 0.5
    %v84 = vmul.f32 %v76, 0.5
    %v85 = vmul.f32 %v77, 0.5
    %v86 = vmul.f32 %v78, 0.5
    %v87 = vmul.f32 %v79, 0.5
    %v88 = vmul.f32 %v80, 0.5
    %v89 = vmul.f32 %v81, 0.5
    %v90 = vmul.f32 %v82, 0.5
    %v91 = vadd.f32 %v83, 0.5
    %v92 = vadd.f32 %v84, 0.5
    %v93 = vadd.f32 %v85, 0.5
    %v94 = vadd.f32 %v86, 0.5
    %v95 = vadd.f32 %v87, 0.5
    %v96 = vadd.f32 %v88, 0.5
    %v97 = vadd.f32 %v89, 0.5
    %v98 = vadd.f32 %v90, 0.5
    %v99 = vsub.f32 1.0, %v91
    %v100 = vsub.f32 1.0, %v92
    %v101 = vsub.f32 1.0, %v93
    %v102 = vsub.f32 1.0, %v94
    %v103 = vsub.f32 1.0, %v95
    %v104 = vsub.f32 1.0, %v96
    %v105 = vsub.f32 1.0, %v97
    %v106 = vsub.f32 1.0, %v98
    %v107 = vadd.f32 %v99, 0.05
    %v108 = vadd.f32 %v100, 0.05
    %v109 = vadd.f32 %v101, 0.05
    %v110 = vadd.f32 %v102, 0.05
    %v111 = vadd.f32 %v103, 0.05
    %v112 = vadd.f32 %v104, 0.05
    %v113 = vadd.f32 %v105, 0.05
    %v114 = vadd.f32 %v106, 0.05
    %v115 = vmin.f32 %v107, 1.0
    %v116 = vmin.f32 %v108, 1.0
    %v117 = vmin.f32 %v109, 1.0
    %v118 = vmin.f32 %v110, 1.0
    %v119 = vmin.f32 %v111, 1.0
    %v120 = vmin.f32 %v112, 1.0
    %v121 = vmin.f32 %v113, 1.0
    %v122 = vmin.f32 %v114, 1.0
    %vm123 = vcmp.gt.f32.partialorder %v59, 0.5
    %vm124 = vcmp.gt.f32.partialorder %v60, 0.5
    %vm125 = vcmp.gt.f32.partialorder %v61, 0.5
    %vm126 = vcmp.gt.f32.partialorder %v62, 0.5
    %vm127 = vcmp.gt.f32.partialorder %v63, 0.5
    %vm128 = vcmp.gt.f32.partialorder %v64, 0.5
    %vm129 = vcmp.gt.f32.partialorder %v65, 0.5
    %vm130 = vcmp.gt.f32.partialorder %v66, 0.5
    %v131 = vsel %vm123, %v91, %v115
    %v132 = vsel %vm124, %v92, %v116
    %v133 = vsel %vm125, %v93, %v117
    %v134 = vsel %vm126, %v94, %v118
    %v135 = vsel %vm127, %v95, %v119
    %v136 = vsel %vm128, %v96, %v120
    %v137 = vsel %vm129, %v97, %v121
    %v138 = vsel %vm130, %v98, %v122
    %v139 = vmax.f32 %v131, 1e-08
    %v140 = vmax.f32 %v132, 1e-08
    %v141 = vmax.f32 %v133, 1e-08
    %v142 = vmax.f32 %v134, 1e-08
    %v143 = vmax.f32 %v135, 1e-08
    %v144 = vmax.f32 %v136, 1e-08
    %v145 = vmax.f32 %v137, 1e-08
    %v146 = vmax.f32 %v138, 1e-08
    %v147 = vlog2.pop %v139
    %v148 = vmul.f32 %v147, 0.6931472
    %v149 = vlog2.pop %v140
    %v150 = vmul.f32 %v149, 0.6931472
    %v151 = vlog2.pop %v141
    %v152 = vmul.f32 %v151, 0.6931472
    %v153 = vlog2.pop %v142
    %v154 = vmul.f32 %v153, 0.6931472
    %v155 = vlog2.pop %v143
    %v156 = vmul.f32 %v155, 0.6931472
    %v157 = vlog2.pop %v144
    %v158 = vmul.f32 %v157, 0.6931472
    %v159 = vlog2.pop %v145
    %v160 = vmul.f32 %v159, 0.6931472
    %v161 = vlog2.pop %v146
    %v162 = vmul.f32 %v161, 0.6931472
    %v163 = vsub.f32 1.0, %v131
    %v164 = vsub.f32 1.0, %v132
    %v165 = vsub.f32 1.0, %v133
    %v166 = vsub.f32 1.0, %v134
    %v167 = vsub.f32 1.0, %v135
    %v168 = vsub.f32 1.0, %v136
    %v169 = vsub.f32 1.0, %v137
    %v170 = vsub.f32 1.0, %v138
    %v171 = vmul.f32 %v163, %v163
    %v172 = vmul.f32 %v164, %v164
    %v173 = vmul.f32 %v165, %v165
    %v174 = vmul.f32 %v166, %v166
    %v175 = vmul.f32 %v167, %v167
    %v176 = vmul.f32 %v168, %v168
    %v177 = vmul.f32 %v169, %v169
    %v178 = vmul.f32 %v170, %v170
    %v179 = vmul.f32 %v171, %v171
    %v180 = vmul.f32 %v172, %v172
    %v181 = vmul.f32 %v173, %v173
    %v182 = vmul.f32 %v174, %v174
    %v183 = vmul.f32 %v175, %v175
    %v184 = vmul.f32 %v176, %v176
    %v185 = vmul.f32 %v177, %v177
    %v186 = vmul.f32 %v178, %v178
    %v187 = vsel %vm123, %v163, %v179
    %v188 = vsel %vm124, %v164, %v180
    %v189 = vsel %vm125, %v165, %v181
    %v190 = vsel %vm126, %v166, %v182
    %v191 = vsel %vm127, %v167, %v183
    %v192 = vsel %vm128, %v168, %v184
    %v193 = vsel %vm129, %v169, %v185
    %v194 = vsel %vm130, %v170, %v186
    %v195 = vmul.f32 %v148, %v187
    %v196 = vmul.f32 %v150, %v188
    %v197 = vmul.f32 %v152, %v189
    %v198 = vmul.f32 %v154, %v190
    %v199 = vmul.f32 %v156, %v191
    %v200 = vmul.f32 %v158, %v192
    %v201 = vmul.f32 %v160, %v193
    %v202 = vmul.f32 %v162, %v194
    %v203 = vrot.slane %v195, 4
    %v204 = vadd.f32 %v195, %v203
    %v205 = vrot.slane %v204, 2
    %v206 = vadd.f32 %v204, %v205
    %v207 = vrot.slane %v206, 1
    %v208 = vadd.f32 %v206, %v207
    %v209 = vrot.slane %v196, 4
    %v210 = vadd.f32 %v196, %v209
    %v211 = vrot.slane %v210, 2
    %v212 = vadd.f32 %v210, %v211
    %v213 = vrot.slane %v212, 1
    %v214 = vadd.f32 %v212, %v213
    %v215 = vrot.slane %v197, 4
    %v216 = vadd.f32 %v197, %v215
    %v217 = vrot.slane %v216, 2
    %v218 = vadd.f32 %v216, %v217
    %v219 = vrot.slane %v218, 1
    %v220 = vadd.f32 %v218, %v219
    %v221 = vrot.slane %v198, 4
    %v222 = vadd.f32 %v198, %v221
    %v223 = vrot.slane %v222, 2
    %v224 = vadd.f32 %v222, %v223
    %v225 = vrot.slane %v224, 1
    %v226 = vadd.f32 %v224, %v225
    %v227 = vrot.slane %v199, 4
    %v228 = vadd.f32 %v199, %v227
    %v229 = vrot.slane %v228, 2
    %v230 = vadd.f32 %v228, %v229
    %v231 = vrot.slane %v230, 1
    %v232 = vadd.f32 %v230, %v231
    %v233 = vrot.slane %v200, 4
    %v234 = vadd.f32 %v200, %v233
    %v235 = vrot.slane %v234, 2
    %v236 = vadd.f32 %v234, %v235
    %v237 = vrot.slane %v236, 1
    %v238 = vadd.f32 %v236, %v237
    %v239 = vrot.slane %v201, 4
    %v240 = vadd.f32 %v201, %v239
    %v241 = vrot.slane %v240, 2
    %v242 = vadd.f32 %v240, %v241
    %v243 = vrot.slane %v242, 1
    %v244 = vadd.f32 %v242, %v243
    %v245 = vrot.slane %v202, 4
    %v246 = vadd.f32 %v202, %v245
    %v247 = vrot.slane %v246, 2
    %v248 = vadd.f32 %v246, %v247
    %v249 = vrot.slane %v248, 1
    %v250 = vadd.f32 %v248, %v249
    %v251 = vld [vmem:[#allocation7] sm:$0xff]
    %v260 = vcombine.low %v208, %v214
    %v261 = vcombine.low %v220, %v226
    %v262 = vcombine.low %v232, %v238
    %v263 = vcombine.low %v244, %v250
    %v265 = vunpack.c.l.s4 1966171168
    %v266 = vunpack.c.0.s8 %v265
    %v267 = vlaneseq
    %v268 = vshrl.u32 %v267, 7
    %v269 = vsub.s32 %v266, %v268
    %v270 = vrot.slane %v260, %v269
    %v272 = vunpack.c.l.s4 1966171168
    %v273 = vunpack.c.0.s8 %v272
    %v274 = vlaneseq
    %v275 = vshrl.u32 %v274, 7
    %v276 = vsub.s32 %v273, %v275
    %v277 = vrot.slane %v261, %v276
    %v279 = vunpack.c.l.s4 1966171168
    %v280 = vunpack.c.0.s8 %v279
    %v281 = vlaneseq
    %v282 = vshrl.u32 %v281, 7
    %v283 = vsub.s32 %v280, %v282
    %v284 = vrot.slane %v262, %v283
    %v286 = vunpack.c.l.s4 1966171168
    %v287 = vunpack.c.0.s8 %v286
    %v288 = vlaneseq
    %v289 = vshrl.u32 %v288, 7
    %v290 = vsub.s32 %v287, %v289
    %v291 = vrot.slane %v263, %v290
    %v292 = vcombine.low %v270, %v277
    %v293 = vcombine.low %v284, %v291
    %v295 = vunpack.c.l.s4 1966171168
    %v296 = vunpack.c.0.s8 %v295
    %v297 = vlaneseq
    %v298 = vshrl.u32 %v297, 7
    %v299 = vsub.s32 %v296, %v298
    %v300 = vrot.slane %v292, %v299
    %v302 = vunpack.c.l.s4 1966171168
    %v303 = vunpack.c.0.s8 %v302
    %v304 = vlaneseq
    %v305 = vshrl.u32 %v304, 7
    %v306 = vsub.s32 %v303, %v305
    %v307 = vrot.slane %v293, %v306
    %v308 = vcombine.low %v300, %v307
    %v310 = vadd.f32 %v251, %v308
    %311 = vst [vmem:[#allocation7] sm:$0xff] %v310
    // Predicated region
    $region22: #{tpu_custom_call.1} parent=1 // pred_check
      _
    $region23: #{tpu_custom_call.1} parent=1 // pred_check_branch
      %313 = sbr.rel (0) target = $region25
    $region24: #{tpu_custom_call.1} parent=1 // pred_region
      %s315 = ssub.s32 128, 128
      %316 = vsyncadd [#allocation4], %s315
      %s318 = sshll.u32 [#allocation7], 4
      %s319 = int_to_ptr.vmem [resolvable:$true] %s318
      %321 = dma.vmem_to_hbm [thread:$0]  %s319, 128, %s2, [#allocation4]
    $region25: #{tpu_custom_call.1} parent=1 // pred_fallthru
      _
    // Predicated region
    $region26: #{tpu_custom_call.1} parent=1 // pred_check
      _
    $region27: #{tpu_custom_call.1} parent=1 // pred_check_branch
      %323 = sbr.rel (0) target = $region29
    $region28: #{tpu_custom_call.1} parent=1 // pred_region
      %324 = dma.done [#allocation4], 128
    $region29: #{tpu_custom_call.1} parent=1 // pred_fallthru
      _
    %325 = vsyncpa [#allocation3], 1
    %326 = vsyncpa [#allocation6], 1
    %327 = vsyncpa [#allocation4], 1

</llo_original>
